<compile_context>
chip_gen: v7x
topology: tpu7x:2x2x1
jax: 0.10.0
libtpu: 0.0.40
codegen_flags: <defaults>
</compile_context>

<pallas_src>
import jax
import jax.numpy as jnp
from jax.experimental import pallas as pl
from jax.experimental.pallas import tpu as pltpu


def _scaled_mse_kernel(x_ref, y_ref, o_ref):
    # Upcast to f32 for the arithmetic, cast back on store.  Cost is hidden under
    # the memory bound; exact for f32 inputs, better-rounded for 16-bit inputs.
    x = x_ref[...].astype(jnp.float32)
    y = y_ref[...].astype(jnp.float32)
    diff = x - y
    o_ref[...] = (0.01 * (diff * diff)).astype(o_ref.dtype)


_LANE_CANDIDATES = (8192, 4096, 2048, 1024, 512, 256, 128)


def scaled_mse_loss(inputs, target):
    """0.01 * mse_loss(inputs, target, reduction='none') via a Pallas TPU kernel."""
    assert inputs.shape == target.shape, "shapes must match (reduction='none')"
    orig_shape = inputs.shape
    dtype = inputs.dtype
    n = int(inputs.size)
    if n == 0:
        return jnp.zeros(orig_shape, dtype)

    itemsize = jnp.dtype(dtype).itemsize
    # sublane packing: 8 rows/vreg for 32-bit, 16 for 16-bit, 32 for 8-bit dtypes
    packing = 8 * max(1, 4 // itemsize)

    x_flat = inputs.reshape(-1)
    y_flat = target.reshape(-1)

    # Pick the widest lane extent that divides n -> reshape is free, no pad needed.
    W = next((w for w in _LANE_CANDIDATES if n % w == 0), None)

    if W is None and n * itemsize <= (2 << 20):
        # Small ragged case: one full-extent 1-D block (always legal), no extra
        # pad/slice HBM passes.
        out_flat = pl.pallas_call(
            _scaled_mse_kernel,
            out_shape=jax.ShapeDtypeStruct((n,), dtype),
        )(x_flat, y_flat)
        return out_flat.reshape(orig_shape)

    padded = False
    if W is None:
        # Large and not divisible by 128 (rare): pad up to the next multiple of 512
        # (at most 511 extra elements).  0.01*0^2 = 0, tail is sliced off, so benign.
        W = 512
        n_pad = pl.cdiv(n, W) * W
        x_flat = jnp.pad(x_flat, (0, n_pad - n))
        y_flat = jnp.pad(y_flat, (0, n_pad - n))
        padded = True

    rows = x_flat.size // W
    x2d = x_flat.reshape(rows, W)
    y2d = y_flat.reshape(rows, W)

    # Row tile sized for ~2 MiB per input block, aligned to the packed sublane
    # tiling for the dtype.  Ragged tails are handled by the cdiv grid.
    target_block_bytes = 2 * 1024 * 1024
    row_tile = max(packing, target_block_bytes // (W * itemsize))
    row_tile = (row_tile // packing) * packing
    if row_tile >= rows:
        row_tile = rows  # full extent along rows: always a legal block shape

    grid = (pl.cdiv(rows, row_tile),)

    out2d = pl.pallas_call(
        _scaled_mse_kernel,
        out_shape=jax.ShapeDtypeStruct((rows, W), dtype),
        grid=grid,
        in_specs=[
            pl.BlockSpec((row_tile, W), lambda i: (i, 0)),
            pl.BlockSpec((row_tile, W), lambda i: (i, 0)),
        ],
        out_specs=pl.BlockSpec((row_tile, W), lambda i: (i, 0)),
        compiler_params=pltpu.CompilerParams(
            dimension_semantics=("parallel",),
            vmem_limit_bytes=32 * 1024 * 1024,
        ),
        cost_estimate=pl.CostEstimate(
            flops=3 * rows * W,
            transcendentals=0,
            bytes_accessed=3 * rows * W * itemsize,
        ),
    )(x2d, y2d)

    if padded:
        return out2d.reshape(-1)[:n].reshape(orig_shape)
    return out2d.reshape(orig_shape)


if __name__ == "__main__":
    key = jax.random.PRNGKey(0)
    k1, k2 = jax.random.split(key)

    # small shape consistent with a generic regression output, NCHW-like
    shape = (2, 4, 16, 16)
    inputs = jax.random.normal(k1, shape, dtype=jnp.float32)
    target = jax.random.normal(k2, shape, dtype=jnp.float32)
    out = jax.block_until_ready(scaled_mse_loss(inputs, target))
    ref = 0.01 * (inputs - target) ** 2
    assert out.shape == shape
    assert jnp.allclose(out, ref, atol=1e-6, rtol=1e-6)

    # non-128-divisible size -> full-extent 1-D path (no pad / slice)
    shape2 = (3, 5, 7)
    a = jax.random.normal(k1, shape2, dtype=jnp.float32)
    b = jax.random.normal(k2, shape2, dtype=jnp.float32)
    out2 = jax.block_until_ready(scaled_mse_loss(a, b))
    ref2 = 0.01 * (a - b) ** 2
    assert out2.shape == shape2
    assert jnp.allclose(out2, ref2, atol=1e-6, rtol=1e-6)

    # medium shape that exercises the multi-step grid with a masked ragged tail
    shape3 = (8, 8, 96, 128)
    c = jax.random.normal(k1, shape3, dtype=jnp.float32)
    d = jax.random.normal(k2, shape3, dtype=jnp.float32)
    out3 = jax.block_until_ready(scaled_mse_loss(c, d))
    ref3 = 0.01 * (c - d) ** 2
    assert out3.shape == shape3
    assert jnp.allclose(out3, ref3, atol=1e-6, rtol=1e-6)

    print("KERNEL_OK")
</pallas_src>

<mosaic_0001>
module attributes {stable_mosaic.version = 11 : i64} {
  func.func @_scaled_mse_kernel(%arg0: i32, %arg1: memref<1x2048xf32, #tpu.memory_space<vmem>>, %arg2: memref<1x2048xf32, #tpu.memory_space<vmem>>, %arg3: memref<1x2048xf32, #tpu.memory_space<vmem>>) attributes {dimension_semantics = [#tpu.dimension_semantics<parallel>], iteration_bounds = array<i64: 1>, scalar_prefetch = 0 : i64, scratch_operands = 0 : i64, tpu.core_type = #tpu.core_type<tc>, window_params = [{transform_indices = @transform_0, window_bounds = array<i64: 1, 2048>}, {transform_indices = @transform_1, window_bounds = array<i64: 1, 2048>}, {transform_indices = @transform_2, window_bounds = array<i64: 1, 2048>}]} {
    %c0 = arith.constant 0 : index
    %c0_0 = arith.constant 0 : index
    %0 = vector.load %arg1[%c0, %c0_0] : memref<1x2048xf32, #tpu.memory_space<vmem>>, vector<1x2048xf32>
    %c0_1 = arith.constant 0 : index
    %c0_2 = arith.constant 0 : index
    %1 = vector.load %arg2[%c0_1, %c0_2] : memref<1x2048xf32, #tpu.memory_space<vmem>>, vector<1x2048xf32>
    %2 = arith.subf %0, %1 : vector<1x2048xf32>
    %3 = arith.mulf %2, %2 : vector<1x2048xf32>
    %cst = arith.constant 0.00999999977 : f32
    %4 = vector.broadcast %cst : f32 to vector<1x2048xf32>
    %5 = arith.mulf %4, %3 : vector<1x2048xf32>
    %c0_3 = arith.constant 0 : index
    %c0_4 = arith.constant 0 : index
    %6 = vector.load %arg3[%c0_3, %c0_4] : memref<1x2048xf32, #tpu.memory_space<vmem>>, vector<1x2048xf32>
    tpu.vector_store %arg3[%c0_3, %c0_4], %5 {strides = array<i32>} : memref<1x2048xf32, #tpu.memory_space<vmem>>, vector<1x2048xf32>,
    return
  }
  func.func @transform_0(%arg0: i32) -> (i32, i32) {
    %c0_i32 = arith.constant 0 : i32
    %c0_i32_0 = arith.constant 0 : i32
    return %arg0, %c0_i32 : i32, i32
  }
  func.func @transform_1(%arg0: i32) -> (i32, i32) {
    %c0_i32 = arith.constant 0 : i32
    %c0_i32_0 = arith.constant 0 : i32
    return %arg0, %c0_i32 : i32, i32
  }
  func.func @transform_2(%arg0: i32) -> (i32, i32) {
    %c0_i32 = arith.constant 0 : i32
    %c0_i32_0 = arith.constant 0 : i32
    return %arg0, %c0_i32 : i32, i32
  }
}

</mosaic_0001>

<llo_original>
// kernel: tpu_custom_call.1
$region0: #{tpu_custom_call.1}
  #allocation0 [shape = 'u32[]', space=smem, size = 0x4, offset = 0x4, fixed_abs, tag = 'smem constant byte address 0x4 - core index']
  #allocation1 [shape = 'u32[144,128]{1,0:T(1,128)}', space=vmem, size = 0x12000, scoped, tag = 'internal scratch']
  %s0 = inlined_call_operand.hbm [shape: f32[1,2048], index: 0, kind: input, shape index: {}]
  %s1 = inlined_call_operand.hbm [shape: f32[1,2048], index: 1, kind: input, shape index: {}]
  %s2 = inlined_call_operand.hbm [shape: f32[1,2048], index: 2, kind: output, shape index: {}]
  %s3 = sld [smem:[#allocation0]]
  $region26: #{tpu_custom_call.1} parent=0
    _
  %s5 = ssub.s32 1, %s3
  %s6 = scalar_select 0, %s5, %s3
  $region1: #{tpu_custom_call.1} parent=0
    #allocation2 [shape = 'u8[8192]{0}', space=vmem, size = 0x2000, scoped, tag = 'input window, operand 0, single buffered']
    #allocation3 [shape = 's32[1]{0}', space=sflag, size = 0x4, scoped, tag = 'scoped memory for tpu_custom_call.1']
    #allocation4 [shape = 's32[1]{0}', space=sflag, size = 0x4, scoped, tag = 'scoped memory for tpu_custom_call.1']
    #allocation5 [shape = 'u8[8192]{0}', space=vmem, size = 0x2000, scoped, tag = 'input window, operand 1, single buffered']
    #allocation6 [shape = 's32[1]{0}', space=sflag, size = 0x4, scoped, tag = 'scoped memory for tpu_custom_call.1']
    #allocation7 [shape = 'u8[8192]{0}', space=vmem, size = 0x2000, scoped, tag = 'output window, operand 0, single buffered']
    %7 = vsyncpa [#allocation3], 0
    %8 = vsyncpa [#allocation6], 0
    %9 = vsyncpa [#allocation4], 0
    // Predicated region
    $region2: #{tpu_custom_call.1} parent=1 // pred_check
      _
    $region3: #{tpu_custom_call.1} parent=1 // pred_check_branch
      %11 = sbr.rel (0) target = $region5
    $region4: #{tpu_custom_call.1} parent=1 // pred_region
      %s13 = ssub.s32 256, 256
      %14 = vsyncadd [#allocation3], %s13
      %s16 = sshll.u32 [#allocation2], 4
      %s17 = int_to_ptr.vmem [resolvable:$true] %s16
      %19 = dma.hbm_to_vmem [thread:$0]  %s0, 256, %s17, [#allocation3]
    $region5: #{tpu_custom_call.1} parent=1 // pred_fallthru
      _
    // Predicated region
    $region6: #{tpu_custom_call.1} parent=1 // pred_check
      _
    $region7: #{tpu_custom_call.1} parent=1 // pred_check_branch
      %21 = sbr.rel (0) target = $region9
    $region8: #{tpu_custom_call.1} parent=1 // pred_region
      %s23 = ssub.s32 256, 256
      %24 = vsyncadd [#allocation6], %s23
      %s26 = sshll.u32 [#allocation5], 4
      %s27 = int_to_ptr.vmem [resolvable:$true] %s26
      %29 = dma.hbm_to_vmem [thread:$0]  %s1, 256, %s27, [#allocation6]
    $region9: #{tpu_custom_call.1} parent=1 // pred_fallthru
      _
    // Predicated region
    $region10: #{tpu_custom_call.1} parent=1 // pred_check
      _
    $region11: #{tpu_custom_call.1} parent=1 // pred_check_branch
      %31 = sbr.rel (0) target = $region13
    $region12: #{tpu_custom_call.1} parent=1 // pred_region
      %32 = dma.done [#allocation3], 256
    $region13: #{tpu_custom_call.1} parent=1 // pred_fallthru
      _
    // Predicated region
    $region14: #{tpu_custom_call.1} parent=1 // pred_check
      _
    $region15: #{tpu_custom_call.1} parent=1 // pred_check_branch
      %34 = sbr.rel (0) target = $region17
    $region16: #{tpu_custom_call.1} parent=1 // pred_region
      %35 = dma.done [#allocation6], 256
    $region17: #{tpu_custom_call.1} parent=1 // pred_fallthru
      _
    %v36 = vld [vmem:[#allocation2] sm:$0xff]
    %v37 = vld [vmem:[#allocation2 + $0x8] sm:$0xff]
    %v38 = vld [vmem:[#allocation5] sm:$0xff]
    %v39 = vld [vmem:[#allocation5 + $0x8] sm:$0xff]
    %v40 = vsub.f32 %v36, %v38
    %v41 = vsub.f32 %v37, %v39
    %v42 = vmul.f32 %v40, %v40
    %v43 = vmul.f32 %v41, %v41
    %v44 = vmul.f32 %v42, 0.01
    %v45 = vmul.f32 %v43, 0.01
    %46 = vst [vmem:[#allocation7] sm:$0xff] %v44
    %47 = vst [vmem:[#allocation7 + $0x8] sm:$0xff] %v45
    // Predicated region
    $region18: #{tpu_custom_call.1} parent=1 // pred_check
      _
    $region19: #{tpu_custom_call.1} parent=1 // pred_check_branch
      %49 = sbr.rel (0) target = $region21
    $region20: #{tpu_custom_call.1} parent=1 // pred_region
      %s51 = ssub.s32 256, 256
      %52 = vsyncadd [#allocation4], %s51
      %s54 = sshll.u32 [#allocation7], 4
      %s55 = int_to_ptr.vmem [resolvable:$true] %s54
      %57 = dma.vmem_to_hbm [thread:$0]  %s55, 256, %s2, [#allocation4]
    $region21: #{tpu_custom_call.1} parent=1 // pred_fallthru
      _
    // Predicated region
    $region22: #{tpu_custom_call.1} parent=1 // pred_check
      _
    $region23: #{tpu_custom_call.1} parent=1 // pred_check_branch
      %59 = sbr.rel (0) target = $region25
    $region24: #{tpu_custom_call.1} parent=1 // pred_region
      %60 = dma.done [#allocation4], 256
    $region25: #{tpu_custom_call.1} parent=1 // pred_fallthru
      _
    %61 = vsyncpa [#allocation3], 1
    %62 = vsyncpa [#allocation6], 1
    %63 = vsyncpa [#allocation4], 1

</llo_original>
